<compile_context>
chip_gen: v5e
topology: v5e:2x2
jax: 0.10.0
libtpu: 0.0.40
codegen_flags: <defaults>
</compile_context>

<pallas_src>
import functools

import jax
import jax.numpy as jnp
from jax import lax
from jax.experimental import pallas as pl
from jax.experimental.pallas import tpu as pltpu


def _round_up(x, m):
    return (x + m - 1) // m * m


def _ln_kernel(x_ref, a_ref, w_ref, b_ref, o_ref, *, eps, inv_d):
    # x_ref: (tm, Df) lane-dense tile; each folded row holds G independent
    #        feature rows of length D concatenated along the lane axis.
    # a_ref: (Df, Df) bf16 block-diagonal 0/1 matrix (1 iff same D-group).
    # w_ref / b_ref: (1, Df) f32 gamma/beta, tiled G times to match the fold.
    x = x_ref[...].astype(jnp.float32)
    a = a_ref[...]

    # Two-term bf16 split -> ~f32-accurate segmented row sums on the MXU.
    xh = x.astype(jnp.bfloat16)
    xl = (x - xh.astype(jnp.float32)).astype(jnp.bfloat16)
    row_sum = (jnp.dot(xh, a, preferred_element_type=jnp.float32)
               + jnp.dot(xl, a, preferred_element_type=jnp.float32))
    mean = row_sum * inv_d                      # per-group mean, lane-broadcast

    xc = x - mean
    sq = xc * xc
    sh = sq.astype(jnp.bfloat16)
    sl = (sq - sh.astype(jnp.float32)).astype(jnp.bfloat16)
    var = (jnp.dot(sh, a, preferred_element_type=jnp.float32)
           + jnp.dot(sl, a, preferred_element_type=jnp.float32)) * inv_d

    inv = lax.rsqrt(var + eps)                  # EUP slot, hidden under DMA
    o_ref[...] = (xc * inv * w_ref[...] + b_ref[...]).astype(o_ref.dtype)


def layer_normalization_4dcf(x, weight, bias, *, eps=1e-5, block_rows=None):
    """x: (B, T, D) with D = Q*C. weight, bias: (D,)."""
    B, T, D = x.shape
    M = B * T

    # Lane-fold factor: pack G rows per 128-lane slab when D divides 128.
    # Fallback G=1 (D >= 128 or 128 % D != 0) is correct but, for D < 128,
    # falls back to masked partial-lane stores (documented perf cliff).
    G = 128 // D if (D < 128 and 128 % D == 0) else 1
    Df = G * D

    itemsize = jnp.dtype(x.dtype).itemsize
    sub = 8 if itemsize >= 4 else (16 if itemsize == 2 else 32)

    # Pad rows only to the fold granularity (<= G*sub - 1 rows), NOT to a
    # multiple of the tile; the ragged last grid block is handled by Pallas.
    M_pad = _round_up(M, G * sub)
    M_f = M_pad // G                            # folded rows (multiple of sub)

    # Block sizing by the *actual* itemsize (bf16 gets the same byte budget).
    bytes_per_row = Df * itemsize
    if block_rows is None:
        block_rows = max(sub, (4 * 1024 * 1024) // bytes_per_row)
    tm = min(_round_up(block_rows, sub), M_f)

    x2 = x.reshape(M, D)
    if M_pad != M:
        x2 = jnp.pad(x2, ((0, M_pad - M), (0, 0)))
    x2 = x2.reshape(M_f, Df)                    # lane-dense slab (last dim 128)

    # gamma/beta: f32, tiled so lane g*D + d holds weight[d] / bias[d].
    w2 = jnp.tile(weight.astype(jnp.float32).reshape(1, D), (1, G))
    b2 = jnp.tile(bias.astype(jnp.float32).reshape(1, D), (1, G))

    # Block-diagonal 0/1 matrix (exact in bf16 for any D); 1/D applied in f32
    # inside the kernel so non-power-of-two D stays exact.
    seg = jnp.arange(Df, dtype=jnp.int32) // D
    a_mat = (seg[:, None] == seg[None, :]).astype(jnp.bfloat16)

    grid = (pl.cdiv(M_f, tm),)
    kernel = functools.partial(_ln_kernel, eps=float(eps), inv_d=1.0 / D)

    cost = pl.CostEstimate(
        flops=int(4 * 2 * M_f * Df * Df + 12 * M_f * Df),
        transcendentals=int(M_f * Df),
        bytes_accessed=int(2 * M_f * Df * itemsize + Df * Df * 2 + 2 * Df * 4),
    )

    out = pl.pallas_call(
        kernel,
        out_shape=jax.ShapeDtypeStruct((M_f, Df), x.dtype),
        grid_spec=pltpu.PrefetchScalarGridSpec(
            num_scalar_prefetch=0,
            grid=grid,
            in_specs=[
                pl.BlockSpec((tm, Df), lambda i: (i, 0)),
                pl.BlockSpec((Df, Df), lambda i: (0, 0)),   # VMEM-resident
                pl.BlockSpec((1, Df), lambda i: (0, 0)),
                pl.BlockSpec((1, Df), lambda i: (0, 0)),
            ],
            out_specs=pl.BlockSpec((tm, Df), lambda i: (i, 0)),
        ),
        compiler_params=pltpu.CompilerParams(
            dimension_semantics=("parallel",),
            vmem_limit_bytes=48 * 1024 * 1024,
        ),
        cost_estimate=cost,
    )(x2, a_mat, w2, b2)

    out = out.reshape(M_pad, D)
    if M_pad != M:
        out = out[:M]
    return out.reshape(B, T, D)


def _reference(x, weight, bias, eps=1e-5):
    xf = x.astype(jnp.float32)
    mean = jnp.mean(xf, axis=-1, keepdims=True)
    var = jnp.mean((xf - mean) ** 2, axis=-1, keepdims=True)
    return ((xf - mean) / jnp.sqrt(var + eps)) * weight + bias


if __name__ == "__main__":
    # Module was constructed as LayerNormalization4DCF((Q, C)) -> LayerNorm(Q*C)
    B, T, Q, C = 2, 8, 4, 8
    D = Q * C  # 32

    key = jax.random.PRNGKey(0)
    kx, kw, kb = jax.random.split(key, 3)
    x = jax.random.normal(kx, (B, T, D), dtype=jnp.float32)
    # nn.LayerNorm default is weight=1, bias=0 — perturb deterministically so
    # the affine path is actually exercised.
    weight = jnp.ones((D,), jnp.float32) + 0.1 * jax.random.normal(kw, (D,), jnp.float32)
    bias = 0.1 * jax.random.normal(kb, (D,), jnp.float32)

    out = jax.block_until_ready(layer_normalization_4dcf(x, weight, bias, eps=1e-5))
    ref = _reference(x, weight, bias)
    assert out.shape == (B, T, D)
    assert jnp.max(jnp.abs(out - ref)) < 2e-4, "mismatch vs reference layernorm"

    # Shape that exercises the small fold-granularity padding path (M % 32 != 0).
    B2, T2 = 3, 50
    x3 = jax.random.normal(jax.random.PRNGKey(1), (B2, T2, D), dtype=jnp.float32)
    out3 = jax.block_until_ready(layer_normalization_4dcf(x3, weight, bias, eps=1e-5))
    ref3 = _reference(x3, weight, bias)
    assert out3.shape == (B2, T2, D)
    assert jnp.max(jnp.abs(out3 - ref3)) < 2e-4, "mismatch on padded shape"

    # Same shape with a forced small tile -> multi-step grid with a ragged
    # final block (exercises the no-pad-to-tile path).
    out4 = jax.block_until_ready(
        layer_normalization_4dcf(x3, weight, bias, eps=1e-5, block_rows=16))
    assert jnp.max(jnp.abs(out4 - ref3)) < 2e-4, "mismatch on ragged-grid path"

    print("KERNEL_OK")
</pallas_src>

<mosaic_0001>
module attributes {stable_mosaic.version = 11 : i64} {
  func.func @_ln_kernel(%arg0: i32, %arg1: memref<8x128xf32, #tpu.memory_space<vmem>>, %arg2: memref<128x128xbf16, #tpu.memory_space<vmem>>, %arg3: memref<1x128xf32, #tpu.memory_space<vmem>>, %arg4: memref<1x128xf32, #tpu.memory_space<vmem>>, %arg5: memref<8x128xf32, #tpu.memory_space<vmem>>) attributes {dimension_semantics = [#tpu.dimension_semantics<parallel>], iteration_bounds = array<i64: 1>, scalar_prefetch = 0 : i64, scratch_operands = 0 : i64, tpu.core_type = #tpu.core_type<tc>, window_params = [{transform_indices = @transform_0, window_bounds = array<i64: 8, 128>}, {pipeline_mode = #tpu.pipeline_mode<synchronous>, transform_indices = @transform_1, window_bounds = array<i64: 128, 128>}, {pipeline_mode = #tpu.pipeline_mode<synchronous>, transform_indices = @transform_2, window_bounds = array<i64: 1, 128>}, {pipeline_mode = #tpu.pipeline_mode<synchronous>, transform_indices = @transform_3, window_bounds = array<i64: 1, 128>}, {transform_indices = @transform_4, window_bounds = array<i64: 8, 128>}]} {
    %c0 = arith.constant 0 : index
    %c0_0 = arith.constant 0 : index
    %0 = vector.load %arg1[%c0, %c0_0] : memref<8x128xf32, #tpu.memory_space<vmem>>, vector<8x128xf32>
    %c0_1 = arith.constant 0 : index
    %c0_2 = arith.constant 0 : index
    %1 = vector.load %arg2[%c0_1, %c0_2] : memref<128x128xbf16, #tpu.memory_space<vmem>>, vector<128x128xbf16>
    %2 = arith.truncf %0 : vector<8x128xf32> to vector<8x128xbf16>
    %3 = arith.extf %2 : vector<8x128xbf16> to vector<8x128xf32>
    %4 = arith.subf %0, %3 : vector<8x128xf32>
    %5 = arith.truncf %4 : vector<8x128xf32> to vector<8x128xbf16>
    %cst = arith.constant dense<0.000000e+00> : vector<8x128xf32>
    %6 = tpu.matmul %2, %1, %cst {dimension_numbers = #tpu.dot_dimension_numbers<[1], [0], [0], [1], [0, 0, 1, 1], [], []>} : vector<8x128xbf16>, vector<128x128xbf16>, vector<8x128xf32> -> vector<8x128xf32>
    %cst_3 = arith.constant dense<0.000000e+00> : vector<8x128xf32>
    %7 = tpu.matmul %5, %1, %cst_3 {dimension_numbers = #tpu.dot_dimension_numbers<[1], [0], [0], [1], [0, 0, 1, 1], [], []>} : vector<8x128xbf16>, vector<128x128xbf16>, vector<8x128xf32> -> vector<8x128xf32>
    %8 = arith.addf %6, %7 : vector<8x128xf32>
    %cst_4 = arith.constant 3.125000e-02 : f32
    %9 = vector.broadcast %cst_4 : f32 to vector<8x128xf32>
    %10 = arith.mulf %8, %9 : vector<8x128xf32>
    %11 = arith.subf %0, %10 : vector<8x128xf32>
    %12 = arith.mulf %11, %11 : vector<8x128xf32>
    %13 = arith.truncf %12 : vector<8x128xf32> to vector<8x128xbf16>
    %14 = arith.extf %13 : vector<8x128xbf16> to vector<8x128xf32>
    %15 = arith.subf %12, %14 : vector<8x128xf32>
    %16 = arith.truncf %15 : vector<8x128xf32> to vector<8x128xbf16>
    %cst_5 = arith.constant dense<0.000000e+00> : vector<8x128xf32>
    %17 = tpu.matmul %13, %1, %cst_5 {dimension_numbers = #tpu.dot_dimension_numbers<[1], [0], [0], [1], [0, 0, 1, 1], [], []>} : vector<8x128xbf16>, vector<128x128xbf16>, vector<8x128xf32> -> vector<8x128xf32>
    %cst_6 = arith.constant dense<0.000000e+00> : vector<8x128xf32>
    %18 = tpu.matmul %16, %1, %cst_6 {dimension_numbers = #tpu.dot_dimension_numbers<[1], [0], [0], [1], [0, 0, 1, 1], [], []>} : vector<8x128xbf16>, vector<128x128xbf16>, vector<8x128xf32> -> vector<8x128xf32>
    %19 = arith.addf %17, %18 : vector<8x128xf32>
    %cst_7 = arith.constant 3.125000e-02 : f32
    %20 = vector.broadcast %cst_7 : f32 to vector<8x128xf32>
    %21 = arith.mulf %19, %20 : vector<8x128xf32>
    %cst_8 = arith.constant 9.99999974E-6 : f32
    %22 = vector.broadcast %cst_8 : f32 to vector<8x128xf32>
    %23 = arith.addf %21, %22 : vector<8x128xf32>
    %24 = math.rsqrt %23 : vector<8x128xf32>
    %25 = arith.mulf %11, %24 : vector<8x128xf32>
    %c0_9 = arith.constant 0 : index
    %c0_10 = arith.constant 0 : index
    %26 = vector.load %arg3[%c0_9, %c0_10] : memref<1x128xf32, #tpu.memory_space<vmem>>, vector<1x128xf32>
    %27 = vector.broadcast %26 : vector<1x128xf32> to vector<8x128xf32>
    %28 = arith.mulf %25, %27 : vector<8x128xf32>
    %c0_11 = arith.constant 0 : index
    %c0_12 = arith.constant 0 : index
    %29 = vector.load %arg4[%c0_11, %c0_12] : memref<1x128xf32, #tpu.memory_space<vmem>>, vector<1x128xf32>
    %30 = vector.broadcast %29 : vector<1x128xf32> to vector<8x128xf32>
    %31 = arith.addf %28, %30 : vector<8x128xf32>
    %c0_13 = arith.constant 0 : index
    %c0_14 = arith.constant 0 : index
    %32 = vector.load %arg5[%c0_13, %c0_14] : memref<8x128xf32, #tpu.memory_space<vmem>>, vector<8x128xf32>
    tpu.vector_store %arg5[%c0_13, %c0_14], %31 {strides = array<i32>} : memref<8x128xf32, #tpu.memory_space<vmem>>, vector<8x128xf32>,
    return
  }
  func.func @transform_0(%arg0: i32) -> (i32, i32) {
    %c0_i32 = arith.constant 0 : i32
    %c0_i32_0 = arith.constant 0 : i32
    return %arg0, %c0_i32 : i32, i32
  }
  func.func @transform_1(%arg0: i32) -> (i32, i32) {
    %c0_i32 = arith.constant 0 : i32
    %c0_i32_0 = arith.constant 0 : i32
    %c0_i32_1 = arith.constant 0 : i32
    return %c0_i32, %c0_i32_0 : i32, i32
  }
  func.func @transform_2(%arg0: i32) -> (i32, i32) {
    %c0_i32 = arith.constant 0 : i32
    %c0_i32_0 = arith.constant 0 : i32
    %c0_i32_1 = arith.constant 0 : i32
    return %c0_i32, %c0_i32_0 : i32, i32
  }
  func.func @transform_3(%arg0: i32) -> (i32, i32) {
    %c0_i32 = arith.constant 0 : i32
    %c0_i32_0 = arith.constant 0 : i32
    %c0_i32_1 = arith.constant 0 : i32
    return %c0_i32, %c0_i32_0 : i32, i32
  }
  func.func @transform_4(%arg0: i32) -> (i32, i32) {
    %c0_i32 = arith.constant 0 : i32
    %c0_i32_0 = arith.constant 0 : i32
    return %arg0, %c0_i32 : i32, i32
  }
}

</mosaic_0001>

<llo_original>
// kernel: tpu_custom_call.1
$region0: #{tpu_custom_call.1}
  #allocation0 [shape = 'u32[]', space=smem, size = 0x4, offset = 0x4, fixed_abs, tag = 'smem constant byte address 0x4 - core index']
  #allocation1 [shape = 'u32[72,128]{1,0:T(1,128)}', space=vmem, size = 0x9000, scoped, tag = 'internal scratch']
  %s0 = inlined_call_operand.hbm [shape: f32[8,128], index: 0, kind: input, shape index: {}]
  %s1 = inlined_call_operand.hbm [shape: bf16[128,128], index: 1, kind: input, shape index: {}]
  %s2 = inlined_call_operand.vmem [shape: f32[1,128], index: 2, kind: input, shape index: {}]
  %s3 = inlined_call_operand.vmem [shape: f32[1,128], index: 3, kind: input, shape index: {}]
  %s4 = inlined_call_operand.hbm [shape: f32[8,128], index: 4, kind: output, shape index: {}]
  %s5 = sld [smem:[#allocation0]]
  $region34: #{tpu_custom_call.1} parent=0
    _
  %s7 = ssub.s32 1, %s5
  %s8 = scalar_select 0, %s7, %s5
  $region1: #{tpu_custom_call.1} parent=0
    #allocation2 [shape = 'u8[4096]{0}', space=vmem, size = 0x1000, scoped, tag = 'input window, operand 0, single buffered']
    #allocation3 [shape = 's32[1]{0}', space=sflag, size = 0x4, scoped, tag = 'scoped memory for tpu_custom_call.1']
    #allocation4 [shape = 's32[1]{0}', space=sflag, size = 0x4, scoped, tag = 'scoped memory for tpu_custom_call.1']
    #allocation5 [shape = 'u8[32768]{0}', space=vmem, size = 0x8000, scoped, tag = 'input window, operand 1, single buffered']
    #allocation6 [shape = 's32[1]{0}', space=sflag, size = 0x4, scoped, tag = 'scoped memory for tpu_custom_call.1']
    #allocation7 [shape = 'u8[4096]{0}', space=vmem, size = 0x1000, scoped, tag = 'output window, operand 0, single buffered']
    %9 = vsyncpa [#allocation3], 0
    %10 = vsyncpa [#allocation6], 0
    %11 = vsyncpa [#allocation4], 0
    // Predicated region
    $region2: #{tpu_custom_call.1} parent=1 // pred_check
      _
    $region3: #{tpu_custom_call.1} parent=1 // pred_check_branch
      %13 = sbr.rel (0) target = $region5
    $region4: #{tpu_custom_call.1} parent=1 // pred_region
      %15 = vsyncadd [#allocation3], 0
      %s17 = sshll.u32 %s0, 4
      %s18 = int_to_ptr.hbm [resolvable:$true] %s17
      %s19 = sshll.u32 [#allocation2], 4
      %s20 = int_to_ptr.vmem [resolvable:$true] %s19
      %22 = dma.hbm_to_vmem [thread:$0]  %s18, 128, %s20, [#allocation3]
    $region5: #{tpu_custom_call.1} parent=1 // pred_fallthru
      _
    // Predicated region
    $region6: #{tpu_custom_call.1} parent=1 // pred_check
      _
    $region7: #{tpu_custom_call.1} parent=1 // pred_check_branch
      %24 = sbr.rel (0) target = $region9
    $region8: #{tpu_custom_call.1} parent=1 // pred_region
      %26 = vsyncadd [#allocation6], 0
      %s27 = sshll.u32 %s1, 4
      %s28 = int_to_ptr.hbm [resolvable:$true] %s27
      %s29 = sshll.u32 [#allocation5], 4
      %s30 = int_to_ptr.vmem [resolvable:$true] %s29
      %35 = dma.hbm_to_vmem [thread:$0]  %s28, 1024, %s30, [#allocation6], 64, 64, 4
    $region9: #{tpu_custom_call.1} parent=1 // pred_fallthru
      _
    // Predicated region
    $region10: #{tpu_custom_call.1} parent=1 // pred_check
      _
    $region11: #{tpu_custom_call.1} parent=1 // pred_check_branch
      %37 = sbr.rel (0) target = $region13
    $region12: #{tpu_custom_call.1} parent=1 // pred_region
      _
    $region13: #{tpu_custom_call.1} parent=1 // pred_fallthru
      _
    // Predicated region
    $region14: #{tpu_custom_call.1} parent=1 // pred_check
      _
    $region15: #{tpu_custom_call.1} parent=1 // pred_check_branch
      %39 = sbr.rel (0) target = $region17
    $region16: #{tpu_custom_call.1} parent=1 // pred_region
      _
    $region17: #{tpu_custom_call.1} parent=1 // pred_fallthru
      _
    // Predicated region
    $region18: #{tpu_custom_call.1} parent=1 // pred_check
      _
    $region19: #{tpu_custom_call.1} parent=1 // pred_check_branch
      %41 = sbr.rel (0) target = $region21
    $region20: #{tpu_custom_call.1} parent=1 // pred_region
      %43 = dma.done [#allocation3], 128
    $region21: #{tpu_custom_call.1} parent=1 // pred_fallthru
      _
    // Predicated region
    $region22: #{tpu_custom_call.1} parent=1 // pred_check
      _
    $region23: #{tpu_custom_call.1} parent=1 // pred_check_branch
      %45 = sbr.rel (0) target = $region25
    $region24: #{tpu_custom_call.1} parent=1 // pred_region
      %47 = dma.done [#allocation6], 1024
    $region25: #{tpu_custom_call.1} parent=1 // pred_fallthru
      _
    %v48 = vld [vmem:[#allocation2] sm:$0xff]
    %v49 = vld [vmem:[#allocation5] sm:$0xf]
    %v50 = vld [vmem:[#allocation5 + $0x4] sm:$0xf]
    %v51 = vld [vmem:[#allocation5 + $0x8] sm:$0xf]
    %v52 = vld [vmem:[#allocation5 + $0xc] sm:$0xf]
    %v53 = vld [vmem:[#allocation5 + $0x10] sm:$0xf]
    %v54 = vld [vmem:[#allocation5 + $0x14] sm:$0xf]
    %v55 = vld [vmem:[#allocation5 + $0x18] sm:$0xf]
    %v56 = vld [vmem:[#allocation5 + $0x1c] sm:$0xf]
    %v57 = vld [vmem:[#allocation5 + $0x20] sm:$0xf]
    %v58 = vld [vmem:[#allocation5 + $0x24] sm:$0xf]
    %v59 = vld [vmem:[#allocation5 + $0x28] sm:$0xf]
    %v60 = vld [vmem:[#allocation5 + $0x2c] sm:$0xf]
    %v61 = vld [vmem:[#allocation5 + $0x30] sm:$0xf]
    %v62 = vld [vmem:[#allocation5 + $0x34] sm:$0xf]
    %v63 = vld [vmem:[#allocation5 + $0x38] sm:$0xf]
    %v64 = vld [vmem:[#allocation5 + $0x3c] sm:$0xf]
    %v65 = vpack.c.bf16 %v48, %v48
    %v66 = vunpack.c.l.bf16 %v65
    %v67 = vsub.f32 %v48, %v66
    %v68 = vpack.c.bf16 %v67, %v67
    %v85 = vunpack.c.l.b16 %v49
    %v86 = vunpack.c.l.b16 %v50
    %v87 = vunpack.c.l.b16 %v51
    %v88 = vunpack.c.l.b16 %v52
    %v89 = vunpack.c.l.b16 %v53
    %v90 = vunpack.c.l.b16 %v54
    %v91 = vunpack.c.l.b16 %v55
    %v92 = vunpack.c.l.b16 %v56
    %v93 = vunpack.c.l.b16 %v57
    %v94 = vunpack.c.l.b16 %v58
    %v95 = vunpack.c.l.b16 %v59
    %v96 = vunpack.c.l.b16 %v60
    %v97 = vunpack.c.l.b16 %v61
    %v98 = vunpack.c.l.b16 %v62
    %v99 = vunpack.c.l.b16 %v63
    %v100 = vunpack.c.l.b16 %v64
    %v101 = vpack.c.b16 %v86, %v85
    %v102 = vpack.c.b16 %v88, %v87
    %v103 = vpack.c.b16 %v90, %v89
    %v104 = vpack.c.b16 %v92, %v91
    %v105 = vpack.c.b16 %v94, %v93
    %v106 = vpack.c.b16 %v96, %v95
    %v107 = vpack.c.b16 %v98, %v97
    %v108 = vpack.c.b16 %v100, %v99
    %117 = vmatpush.bf16.msra.mxu0 %v108
    %118 = vmatpush.bf16.msra.mxu0 %v107
    %119 = vmatpush.bf16.msra.mxu0 %v106
    %120 = vmatpush.bf16.msra.mxu0 %v105
    %121 = vmatpush.bf16.msra.mxu0 %v104
    %122 = vmatpush.bf16.msra.mxu0 %v103
    %123 = vmatpush.bf16.msra.mxu0 %v102
    %124 = vmatpush.bf16.msra.mxu0 %v101
    %125 = vmatmul.bf16.gmra.mxu0 %v68
    %v126 = vpop.f32.mrf.mxu0
    %v127 = vadd.f32 0.0, %v126
    %v128 = vpop.f32.mrf.mxu0
    %129 = vdwg.mxu0
    %130 = vmatpush.bf16.msra.mxu0 %v108
    %131 = vmatpush.bf16.msra.mxu0 %v107
    %132 = vmatpush.bf16.msra.mxu0 %v106
    %133 = vmatpush.bf16.msra.mxu0 %v105
    %134 = vmatpush.bf16.msra.mxu0 %v104
    %135 = vmatpush.bf16.msra.mxu0 %v103
    %136 = vmatpush.bf16.msra.mxu0 %v102
    %137 = vmatpush.bf16.msra.mxu0 %v101
    %138 = vmatmul.bf16.gmra.mxu0 %v65
    %v139 = vpop.f32.mrf.mxu0
    %v140 = vadd.f32 %v127, %v139
    %v141 = vpop.f32.mrf.mxu0
    %142 = vdwg.mxu0
    %v143 = vmul.f32 %v140, 0.03125
    %v144 = vsub.f32 %v48, %v143
    %v145 = vmul.f32 %v144, %v144
    %v146 = vpack.c.bf16 %v145, %v145
    %v147 = vunpack.c.l.bf16 %v146
    %v148 = vsub.f32 %v145, %v147
    %v149 = vpack.c.bf16 %v148, %v148
    %150 = vmatpush.bf16.msra.mxu0 %v108
    %151 = vmatpush.bf16.msra.mxu0 %v107
    %152 = vmatpush.bf16.msra.mxu0 %v106
    %153 = vmatpush.bf16.msra.mxu0 %v105
    %154 = vmatpush.bf16.msra.mxu0 %v104
    %155 = vmatpush.bf16.msra.mxu0 %v103
    %156 = vmatpush.bf16.msra.mxu0 %v102
    %157 = vmatpush.bf16.msra.mxu0 %v101
    %158 = vmatmul.bf16.gmra.mxu0 %v149
    %v159 = vpop.f32.mrf.mxu0
    %v160 = vadd.f32 0.0, %v159
    %v161 = vpop.f32.mrf.mxu0
    %162 = vdwg.mxu0
    %163 = vmatpush.bf16.msra.mxu0 %v108
    %164 = vmatpush.bf16.msra.mxu0 %v107
    %165 = vmatpush.bf16.msra.mxu0 %v106
    %166 = vmatpush.bf16.msra.mxu0 %v105
    %167 = vmatpush.bf16.msra.mxu0 %v104
    %168 = vmatpush.bf16.msra.mxu0 %v103
    %169 = vmatpush.bf16.msra.mxu0 %v102
    %170 = vmatpush.bf16.msra.mxu0 %v101
    %171 = vmatmul.bf16.gmra.mxu0 %v146
    %v172 = vpop.f32.mrf.mxu0
    %v173 = vadd.f32 %v160, %v172
    %v174 = vpop.f32.mrf.mxu0
    %175 = vdwg.mxu0
    %v176 = vmul.f32 %v173, 0.03125
    %v177 = vadd.f32 %v176, 1e-05
    %v178 = vrsqrt.pop %v177
    %v179 = vmul.f32 %v178, %v177
    %v180 = vmul.f32 %v179, %v178
    %v181 = vmul.f32 0.5, %v180
    %v182 = vsub.f32 1.5, %v181
    %v183 = vmul.f32 %v178, %v182
    %vm184 = vweird.f32 %v177
    %vm185 = vweird.f32 %v178
    %vm186 = vmor %vm184, %vm185
    %v187 = vsel %vm186, %v178, %v183
    %v188 = vmul.f32 %v144, %v187
    %v189 = vld [vmem:[%s2] sm:$0x1]
    %v191 = vperm.slane %v189, 0
    %v193 = vmul.f32 %v188, %v191
    %v194 = vld [vmem:[%s3] sm:$0x1]
    %v196 = vperm.slane %v194, 0
    %v198 = vadd.f32 %v193, %v196
    %199 = vst [vmem:[#allocation7] sm:$0xff] %v198
    // Predicated region
    $region26: #{tpu_custom_call.1} parent=1 // pred_check
      _
    $region27: #{tpu_custom_call.1} parent=1 // pred_check_branch
      %201 = sbr.rel (0) target = $region29
    $region28: #{tpu_custom_call.1} parent=1 // pred_region
      %203 = vsyncadd [#allocation4], 0
      %s205 = sshll.u32 [#allocation7], 4
      %s206 = int_to_ptr.vmem [resolvable:$true] %s205
      %s207 = sshll.u32 %s4, 4
      %s208 = int_to_ptr.hbm [resolvable:$true] %s207
      %210 = dma.vmem_to_hbm [thread:$0]  %s206, 128, %s208, [#allocation4]
    $region29: #{tpu_custom_call.1} parent=1 // pred_fallthru
      _
    // Predicated region
    $region30: #{tpu_custom_call.1} parent=1 // pred_check
      _
    $region31: #{tpu_custom_call.1} parent=1 // pred_check_branch
      %212 = sbr.rel (0) target = $region33
    $region32: #{tpu_custom_call.1} parent=1 // pred_region
      %214 = dma.done [#allocation4], 128
    $region33: #{tpu_custom_call.1} parent=1 // pred_fallthru
      _
    %215 = vsyncpa [#allocation3], 1
    %216 = vsyncpa [#allocation6], 1
    %217 = vsyncpa [#allocation4], 1

</llo_original>
